<compile_context>
chip_gen: v5e
topology: v5e:2x2
jax: 0.10.0
libtpu: 0.0.40
codegen_flags: <defaults>
</compile_context>

<pallas_src>
import functools

import jax
import jax.numpy as jnp
import numpy as np
from jax.experimental import pallas as pl
from jax.experimental.pallas import tpu as pltpu


def _round_up(x, m):
    return ((x + m - 1) // m) * m


def _static_value(a):
    """Concrete numpy value if `a` is not a tracer, else None."""
    try:
        return np.asarray(a)
    except Exception:
        return None


def wcompute_kernel(x_ref, xt_ref, w_ref, out_ref, *, tile_i, n_nodes, n_j_pad, c, static_signs):
    # x_ref:   (tile_i, C)      VMEM  i-rows on sublanes, channels on lanes (pre-scaled by |w1'|
    #                                 on the static-sign path)
    # xt_ref:  (C, n_j_pad)     VMEM  same data transposed, j-nodes on lanes (zero-padded cols)
    # w_ref:   (C,)             SMEM  per-channel weight; only read when static_signs is None
    # out_ref: (tile_i, n_j_pad) VMEM row-softmaxed adjacency tile
    it = pl.program_id(1)

    # Channel-loop contraction with a resident (tile_i, n_j_pad) accumulator.  Each channel reads
    # one lane column of x_ref (tile_i, 1) and one sublane row of xt_ref (1, n_j_pad); both are
    # single-vreg extracts whose broadcasts are reused across the whole output tile, so the XLU
    # load stays far below the VALU load.
    s = jnp.zeros((tile_i, n_j_pad), dtype=jnp.float32)
    for ch in range(c):
        if static_signs is not None and static_signs[ch] == 0.0:
            continue  # zero-weight channel contributes nothing
        xi = x_ref[:, ch:ch + 1]        # (tile_i, 1): varies along sublanes (i)
        xj = xt_ref[ch:ch + 1, :]       # (1, n_j_pad): varies along lanes (j)
        d = jnp.abs(xi - xj)
        if static_signs is None:
            s = s + w_ref[ch] * d       # fallback: traced weights, 4 VALU ops/channel
        elif static_signs[ch] > 0.0:
            s = s + d                   # |w| folded into inputs: 3 VALU ops/channel
        else:
            s = s - d

    # Self-edge mask (W_id = eye(N)) generated in-kernel from a single 2-D iota pair, plus the
    # j-padding mask.  Diagonal uses -1e8 (vs. reference's score-1e8); post-softmax both underflow
    # to exactly 0.  Padded columns use -inf so they contribute exactly 0 to the denominator.
    row = it * tile_i + jax.lax.broadcasted_iota(jnp.int32, (tile_i, n_j_pad), 0)
    col = jax.lax.broadcasted_iota(jnp.int32, (tile_i, n_j_pad), 1)
    s = jnp.where(row == col, -1e8, s)
    if n_j_pad > n_nodes:
        s = jnp.where(col >= n_nodes, -jnp.inf, s)

    # Softmax over j (lanes).  exp on the EUP; divide replaced by an approximate EUP reciprocal.
    m = jnp.max(s, axis=-1, keepdims=True)
    e = jnp.exp(s - m)
    denom = jnp.sum(e, axis=-1, keepdims=True)
    out_ref[...] = e * pl.reciprocal(denom, approx=True)


def wcompute(x, y, conv_w, conv_b, bn_gamma, bn_beta, bn_mean, bn_var, eps=1e-5):
    bs, n, c = x.shape
    x = x.astype(jnp.float32)

    w = conv_w.reshape(-1).astype(jnp.float32)       # (2C,)
    w1 = w[:c]
    bn_scale = (bn_gamma.astype(jnp.float32) /
                jnp.sqrt(bn_var.astype(jnp.float32) + eps)).reshape(())
    w1_eff = w1 * bn_scale                            # (C,) BatchNorm scale folded into conv w

    # NOTE: the y-term, conv bias and BatchNorm shift are constant over the softmax (j) axis, so
    # softmax shift-invariance cancels them exactly — they are intentionally not computed.
    _ = (y, conv_b, bn_beta, bn_mean)

    # Fold |w1'| into the inputs and bake the signs statically when the weights are concrete
    # (inference path); otherwise fall back to an in-kernel SMEM weight multiply.
    w_np = _static_value(w1_eff)
    if w_np is not None:
        static_signs = tuple(float(np.sign(v)) for v in w_np)
        x_in = x * jnp.abs(w1_eff)[None, None, :]
        w_smem = jnp.abs(w1_eff)                      # not read by the kernel on this path
    else:
        static_signs = None
        x_in = x
        w_smem = w1_eff

    # Pad j (lanes) to a multiple of 128 for lane-dense vregs/stores; pad i (sublanes) to 8.
    n_j_pad = _round_up(n, 128)
    n_i_pad = _round_up(n, 8)

    # Pick tile_i: largest multiple of 8 (<= 256) dividing n_i_pad whose double-buffered
    # working set fits the VMEM budget.  Working set per step:
    #   2*x(tile_i,C) + 2*xt(C,n_j) + 2*out(tile_i,n_j) + accumulator/temps (~2*tile_i*n_j), f32.
    vmem_budget = 24 * 1024 * 1024
    cands = [t for t in range(8, min(256, n_i_pad) + 1, 8) if n_i_pad % t == 0]
    tile_i, est = None, None
    for t in sorted(cands, reverse=True):
        e_bytes = 4 * (2 * t * c + 2 * c * n_j_pad + 4 * t * n_j_pad)
        if e_bytes <= vmem_budget:
            tile_i, est = t, e_bytes
            break
    if tile_i is None:
        tile_i = min(cands)
        est = 4 * (2 * tile_i * c + 2 * c * n_j_pad + 4 * tile_i * n_j_pad)
    # Explicit scoped-VMEM limit with headroom; capped so it stays safe on v7x (64 MiB physical).
    vmem_limit = int(min(48 * 1024 * 1024, max(32 * 1024 * 1024, 2 * est)))

    x_pad = jnp.pad(x_in, ((0, 0), (0, n_i_pad - n), (0, 0)))                    # (bs, Ni, C)
    xt_pad = jnp.pad(jnp.swapaxes(x_in, 1, 2), ((0, 0), (0, 0), (0, n_j_pad - n)))  # (bs, C, Nj)

    grid = (bs, n_i_pad // tile_i)   # batch outermost so xt stays resident across i-tiles
    kernel = functools.partial(wcompute_kernel, tile_i=tile_i, n_nodes=n,
                               n_j_pad=n_j_pad, c=c, static_signs=static_signs)

    out = pl.pallas_call(
        kernel,
        out_shape=jax.ShapeDtypeStruct((bs, n_i_pad, n_j_pad), jnp.float32),
        grid_spec=pltpu.PrefetchScalarGridSpec(
            num_scalar_prefetch=0,
            grid=grid,
            in_specs=[
                pl.BlockSpec((None, tile_i, c), lambda b, it: (b, it, 0)),       # x  (i rows)
                pl.BlockSpec((None, c, n_j_pad), lambda b, it: (b, 0, 0)),       # x^T (j lanes)
                pl.BlockSpec(memory_space=pltpu.MemorySpace.SMEM),               # weights
            ],
            out_specs=pl.BlockSpec((None, tile_i, n_j_pad), lambda b, it: (b, it, 0)),
        ),
        compiler_params=pltpu.CompilerParams(
            dimension_semantics=("parallel", "parallel"),
            vmem_limit_bytes=vmem_limit,
        ),
    )(x_pad, xt_pad, w_smem)

    return out[:, :n, :n]


def wcompute_reference(x, y, w_id, conv_w, conv_b, bn_gamma, bn_beta, bn_mean, bn_var, eps=1e-5):
    """Pure-JAX port of the PyTorch forward (eval-mode BatchNorm)."""
    bs, N, C = x.shape
    W1 = x[:, :, None, :]                                # (bs, N, 1, C)
    W2 = x[:, None, :, :]                                # (bs, 1, N, C)
    W_new = jnp.abs(W1 - W2)                             # (bs, N, N, C)
    W_new = jnp.transpose(W_new, (0, 3, 2, 1))           # transpose(1,3) -> (bs, C, N, N)
    y_exp = jnp.broadcast_to(y.reshape(bs, C, 1, 1), W_new.shape)
    W_cat = jnp.concatenate([W_new, y_exp], axis=1)      # (bs, 2C, N, N)
    w = conv_w.reshape(-1)
    conv = jnp.einsum("bchw,c->bhw", W_cat, w) + conv_b.reshape(())   # (bs, N, N)
    scale = bn_gamma / jnp.sqrt(bn_var + eps)
    conv = conv * scale + (bn_beta - bn_mean * scale)
    conv = jnp.transpose(conv[:, None, :, :], (0, 3, 2, 1))[..., 0]   # transpose(1,3) + squeeze
    conv = conv - w_id * 1e8
    return jax.nn.softmax(conv, axis=2)


if __name__ == "__main__":
    bs, N, C = 2, 8, 32

    key = jax.random.PRNGKey(0)
    kx, ky, kw, kb = jax.random.split(key, 4)

    x = jax.random.normal(kx, (bs, N, C), dtype=jnp.float32)
    y = jax.random.normal(ky, (bs, C), dtype=jnp.float32)
    w_id = jnp.broadcast_to(jnp.eye(N, dtype=jnp.float32), (bs, N, N))   # reference only

    # Conv2d(2C, 1, kernel=1) weight; PyTorch default bias init U(-1/sqrt(fan_in), 1/sqrt(fan_in)).
    conv_w = jax.random.normal(kw, (2 * C,), dtype=jnp.float32) * np.sqrt(2.0 / 1.0)
    bound = 1.0 / np.sqrt(2 * C)
    conv_b = jax.random.uniform(kb, (1,), minval=-bound, maxval=bound, dtype=jnp.float32)
    # BatchNorm2d(1): gamma=1, beta=0, running_mean=0, running_var=1
    bn_gamma = jnp.ones((1,), jnp.float32)
    bn_beta = jnp.zeros((1,), jnp.float32)
    bn_mean = jnp.zeros((1,), jnp.float32)
    bn_var = jnp.ones((1,), jnp.float32)

    out = wcompute(x, y, conv_w, conv_b, bn_gamma, bn_beta, bn_mean, bn_var)
    out = jax.block_until_ready(out)

    ref = wcompute_reference(x, y, w_id, conv_w, conv_b, bn_gamma, bn_beta, bn_mean, bn_var)
    # Tolerance covers the approximate (EUP) reciprocal and the (exact-in-math) dropped softmax
    # offset, which differ from the reference only in low-order bits.
    np.testing.assert_allclose(np.asarray(out), np.asarray(ref), rtol=5e-3, atol=5e-4)

    print("KERNEL_OK")
</pallas_src>

<mosaic_0001>
module attributes {stable_mosaic.version = 11 : i64} {
  func.func @wcompute_kernel(%arg0: i32, %arg1: i32, %arg2: memref<1x8x32xf32, #tpu.memory_space<vmem>>, %arg3: memref<1x32x128xf32, #tpu.memory_space<vmem>>, %arg4: memref<32xf32, #tpu.memory_space<smem>>, %arg5: memref<1x8x128xf32, #tpu.memory_space<vmem>>) attributes {dimension_semantics = [#tpu.dimension_semantics<parallel>, #tpu.dimension_semantics<parallel>], iteration_bounds = array<i64: 2, 1>, scalar_prefetch = 0 : i64, scratch_operands = 0 : i64, tpu.core_type = #tpu.core_type<tc>, window_params = [{transform_indices = @transform_0, window_bounds = array<i64: 1, 8, 32>}, {transform_indices = @transform_1, window_bounds = array<i64: 1, 32, 128>}, {transform_indices = @transform_2, window_bounds = array<i64: 32>}, {transform_indices = @transform_3, window_bounds = array<i64: 1, 8, 128>}]} {
    %cst = arith.constant 0.000000e+00 : f32
    %0 = vector.broadcast %cst : f32 to vector<8x128xf32>
    %c0 = arith.constant 0 : index
    %c0_0 = arith.constant 0 : index
    %c0_1 = arith.constant 0 : index
    %1 = vector.load %arg2[%c0, %c0_0, %c0_1] : memref<1x8x32xf32, #tpu.memory_space<vmem>>, vector<1x8x1xf32>
    %2 = vector.shape_cast %1 : vector<1x8x1xf32> to vector<8x1xf32>
    %c0_2 = arith.constant 0 : index
    %c0_3 = arith.constant 0 : index
    %c0_4 = arith.constant 0 : index
    %3 = vector.load %arg3[%c0_2, %c0_3, %c0_4] : memref<1x32x128xf32, #tpu.memory_space<vmem>>, vector<1x1x128xf32>
    %4 = vector.shape_cast %3 : vector<1x1x128xf32> to vector<1x128xf32>
    %5 = vector.broadcast %2 : vector<8x1xf32> to vector<8x128xf32>
    %6 = vector.broadcast %4 : vector<1x128xf32> to vector<8x128xf32>
    %7 = arith.subf %5, %6 : vector<8x128xf32>
    %8 = math.absf %7 : vector<8x128xf32>
    %9 = arith.addf %0, %8 : vector<8x128xf32>
    %c0_5 = arith.constant 0 : index
    %c0_6 = arith.constant 0 : index
    %c1 = arith.constant 1 : index
    %10 = vector.load %arg2[%c0_5, %c0_6, %c1] : memref<1x8x32xf32, #tpu.memory_space<vmem>>, vector<1x8x1xf32>
    %11 = vector.shape_cast %10 : vector<1x8x1xf32> to vector<8x1xf32>
    %c0_7 = arith.constant 0 : index
    %c1_8 = arith.constant 1 : index
    %c0_9 = arith.constant 0 : index
    %12 = vector.load %arg3[%c0_7, %c1_8, %c0_9] : memref<1x32x128xf32, #tpu.memory_space<vmem>>, vector<1x1x128xf32>
    %13 = vector.shape_cast %12 : vector<1x1x128xf32> to vector<1x128xf32>
    %14 = vector.broadcast %11 : vector<8x1xf32> to vector<8x128xf32>
    %15 = vector.broadcast %13 : vector<1x128xf32> to vector<8x128xf32>
    %16 = arith.subf %14, %15 : vector<8x128xf32>
    %17 = math.absf %16 : vector<8x128xf32>
    %18 = arith.addf %9, %17 : vector<8x128xf32>
    %c0_10 = arith.constant 0 : index
    %c0_11 = arith.constant 0 : index
    %c2 = arith.constant 2 : index
    %19 = vector.load %arg2[%c0_10, %c0_11, %c2] : memref<1x8x32xf32, #tpu.memory_space<vmem>>, vector<1x8x1xf32>
    %20 = vector.shape_cast %19 : vector<1x8x1xf32> to vector<8x1xf32>
    %c0_12 = arith.constant 0 : index
    %c2_13 = arith.constant 2 : index
    %c0_14 = arith.constant 0 : index
    %21 = vector.load %arg3[%c0_12, %c2_13, %c0_14] : memref<1x32x128xf32, #tpu.memory_space<vmem>>, vector<1x1x128xf32>
    %22 = vector.shape_cast %21 : vector<1x1x128xf32> to vector<1x128xf32>
    %23 = vector.broadcast %20 : vector<8x1xf32> to vector<8x128xf32>
    %24 = vector.broadcast %22 : vector<1x128xf32> to vector<8x128xf32>
    %25 = arith.subf %23, %24 : vector<8x128xf32>
    %26 = math.absf %25 : vector<8x128xf32>
    %27 = arith.subf %18, %26 : vector<8x128xf32>
    %c0_15 = arith.constant 0 : index
    %c0_16 = arith.constant 0 : index
    %c3 = arith.constant 3 : index
    %28 = vector.load %arg2[%c0_15, %c0_16, %c3] : memref<1x8x32xf32, #tpu.memory_space<vmem>>, vector<1x8x1xf32>
    %29 = vector.shape_cast %28 : vector<1x8x1xf32> to vector<8x1xf32>
    %c0_17 = arith.constant 0 : index
    %c3_18 = arith.constant 3 : index
    %c0_19 = arith.constant 0 : index
    %30 = vector.load %arg3[%c0_17, %c3_18, %c0_19] : memref<1x32x128xf32, #tpu.memory_space<vmem>>, vector<1x1x128xf32>
    %31 = vector.shape_cast %30 : vector<1x1x128xf32> to vector<1x128xf32>
    %32 = vector.broadcast %29 : vector<8x1xf32> to vector<8x128xf32>
    %33 = vector.broadcast %31 : vector<1x128xf32> to vector<8x128xf32>
    %34 = arith.subf %32, %33 : vector<8x128xf32>
    %35 = math.absf %34 : vector<8x128xf32>
    %36 = arith.subf %27, %35 : vector<8x128xf32>
    %c0_20 = arith.constant 0 : index
    %c0_21 = arith.constant 0 : index
    %c4 = arith.constant 4 : index
    %37 = vector.load %arg2[%c0_20, %c0_21, %c4] : memref<1x8x32xf32, #tpu.memory_space<vmem>>, vector<1x8x1xf32>
    %38 = vector.shape_cast %37 : vector<1x8x1xf32> to vector<8x1xf32>
    %c0_22 = arith.constant 0 : index
    %c4_23 = arith.constant 4 : index
    %c0_24 = arith.constant 0 : index
    %39 = vector.load %arg3[%c0_22, %c4_23, %c0_24] : memref<1x32x128xf32, #tpu.memory_space<vmem>>, vector<1x1x128xf32>
    %40 = vector.shape_cast %39 : vector<1x1x128xf32> to vector<1x128xf32>
    %41 = vector.broadcast %38 : vector<8x1xf32> to vector<8x128xf32>
    %42 = vector.broadcast %40 : vector<1x128xf32> to vector<8x128xf32>
    %43 = arith.subf %41, %42 : vector<8x128xf32>
    %44 = math.absf %43 : vector<8x128xf32>
    %45 = arith.addf %36, %44 : vector<8x128xf32>
    %c0_25 = arith.constant 0 : index
    %c0_26 = arith.constant 0 : index
    %c5 = arith.constant 5 : index
    %46 = vector.load %arg2[%c0_25, %c0_26, %c5] : memref<1x8x32xf32, #tpu.memory_space<vmem>>, vector<1x8x1xf32>
    %47 = vector.shape_cast %46 : vector<1x8x1xf32> to vector<8x1xf32>
    %c0_27 = arith.constant 0 : index
    %c5_28 = arith.constant 5 : index
    %c0_29 = arith.constant 0 : index
    %48 = vector.load %arg3[%c0_27, %c5_28, %c0_29] : memref<1x32x128xf32, #tpu.memory_space<vmem>>, vector<1x1x128xf32>
    %49 = vector.shape_cast %48 : vector<1x1x128xf32> to vector<1x128xf32>
    %50 = vector.broadcast %47 : vector<8x1xf32> to vector<8x128xf32>
    %51 = vector.broadcast %49 : vector<1x128xf32> to vector<8x128xf32>
    %52 = arith.subf %50, %51 : vector<8x128xf32>
    %53 = math.absf %52 : vector<8x128xf32>
    %54 = arith.addf %45, %53 : vector<8x128xf32>
    %c0_30 = arith.constant 0 : index
    %c0_31 = arith.constant 0 : index
    %c6 = arith.constant 6 : index
    %55 = vector.load %arg2[%c0_30, %c0_31, %c6] : memref<1x8x32xf32, #tpu.memory_space<vmem>>, vector<1x8x1xf32>
    %56 = vector.shape_cast %55 : vector<1x8x1xf32> to vector<8x1xf32>
    %c0_32 = arith.constant 0 : index
    %c6_33 = arith.constant 6 : index
    %c0_34 = arith.constant 0 : index
    %57 = vector.load %arg3[%c0_32, %c6_33, %c0_34] : memref<1x32x128xf32, #tpu.memory_space<vmem>>, vector<1x1x128xf32>
    %58 = vector.shape_cast %57 : vector<1x1x128xf32> to vector<1x128xf32>
    %59 = vector.broadcast %56 : vector<8x1xf32> to vector<8x128xf32>
    %60 = vector.broadcast %58 : vector<1x128xf32> to vector<8x128xf32>
    %61 = arith.subf %59, %60 : vector<8x128xf32>
    %62 = math.absf %61 : vector<8x128xf32>
    %63 = arith.addf %54, %62 : vector<8x128xf32>
    %c0_35 = arith.constant 0 : index
    %c0_36 = arith.constant 0 : index
    %c7 = arith.constant 7 : index
    %64 = vector.load %arg2[%c0_35, %c0_36, %c7] : memref<1x8x32xf32, #tpu.memory_space<vmem>>, vector<1x8x1xf32>
    %65 = vector.shape_cast %64 : vector<1x8x1xf32> to vector<8x1xf32>
    %c0_37 = arith.constant 0 : index
    %c7_38 = arith.constant 7 : index
    %c0_39 = arith.constant 0 : index
    %66 = vector.load %arg3[%c0_37, %c7_38, %c0_39] : memref<1x32x128xf32, #tpu.memory_space<vmem>>, vector<1x1x128xf32>
    %67 = vector.shape_cast %66 : vector<1x1x128xf32> to vector<1x128xf32>
    %68 = vector.broadcast %65 : vector<8x1xf32> to vector<8x128xf32>
    %69 = vector.broadcast %67 : vector<1x128xf32> to vector<8x128xf32>
    %70 = arith.subf %68, %69 : vector<8x128xf32>
    %71 = math.absf %70 : vector<8x128xf32>
    %72 = arith.subf %63, %71 : vector<8x128xf32>
    %c0_40 = arith.constant 0 : index
    %c0_41 = arith.constant 0 : index
    %c8 = arith.constant 8 : index
    %73 = vector.load %arg2[%c0_40, %c0_41, %c8] : memref<1x8x32xf32, #tpu.memory_space<vmem>>, vector<1x8x1xf32>
    %74 = vector.shape_cast %73 : vector<1x8x1xf32> to vector<8x1xf32>
    %c0_42 = arith.constant 0 : index
    %c8_43 = arith.constant 8 : index
    %c0_44 = arith.constant 0 : index
    %75 = vector.load %arg3[%c0_42, %c8_43, %c0_44] : memref<1x32x128xf32, #tpu.memory_space<vmem>>, vector<1x1x128xf32>
    %76 = vector.shape_cast %75 : vector<1x1x128xf32> to vector<1x128xf32>
    %77 = vector.broadcast %74 : vector<8x1xf32> to vector<8x128xf32>
    %78 = vector.broadcast %76 : vector<1x128xf32> to vector<8x128xf32>
    %79 = arith.subf %77, %78 : vector<8x128xf32>
    %80 = math.absf %79 : vector<8x128xf32>
    %81 = arith.addf %72, %80 : vector<8x128xf32>
    %c0_45 = arith.constant 0 : index
    %c0_46 = arith.constant 0 : index
    %c9 = arith.constant 9 : index
    %82 = vector.load %arg2[%c0_45, %c0_46, %c9] : memref<1x8x32xf32, #tpu.memory_space<vmem>>, vector<1x8x1xf32>
    %83 = vector.shape_cast %82 : vector<1x8x1xf32> to vector<8x1xf32>
    %c0_47 = arith.constant 0 : index
    %c9_48 = arith.constant 9 : index
    %c0_49 = arith.constant 0 : index
    %84 = vector.load %arg3[%c0_47, %c9_48, %c0_49] : memref<1x32x128xf32, #tpu.memory_space<vmem>>, vector<1x1x128xf32>
    %85 = vector.shape_cast %84 : vector<1x1x128xf32> to vector<1x128xf32>
    %86 = vector.broadcast %83 : vector<8x1xf32> to vector<8x128xf32>
    %87 = vector.broadcast %85 : vector<1x128xf32> to vector<8x128xf32>
    %88 = arith.subf %86, %87 : vector<8x128xf32>
    %89 = math.absf %88 : vector<8x128xf32>
    %90 = arith.subf %81, %89 : vector<8x128xf32>
    %c0_50 = arith.constant 0 : index
    %c0_51 = arith.constant 0 : index
    %c10 = arith.constant 10 : index
    %91 = vector.load %arg2[%c0_50, %c0_51, %c10] : memref<1x8x32xf32, #tpu.memory_space<vmem>>, vector<1x8x1xf32>
    %92 = vector.shape_cast %91 : vector<1x8x1xf32> to vector<8x1xf32>
    %c0_52 = arith.constant 0 : index
    %c10_53 = arith.constant 10 : index
    %c0_54 = arith.constant 0 : index
    %93 = vector.load %arg3[%c0_52, %c10_53, %c0_54] : memref<1x32x128xf32, #tpu.memory_space<vmem>>, vector<1x1x128xf32>
    %94 = vector.shape_cast %93 : vector<1x1x128xf32> to vector<1x128xf32>
    %95 = vector.broadcast %92 : vector<8x1xf32> to vector<8x128xf32>
    %96 = vector.broadcast %94 : vector<1x128xf32> to vector<8x128xf32>
    %97 = arith.subf %95, %96 : vector<8x128xf32>
    %98 = math.absf %97 : vector<8x128xf32>
    %99 = arith.subf %90, %98 : vector<8x128xf32>
    %c0_55 = arith.constant 0 : index
    %c0_56 = arith.constant 0 : index
    %c11 = arith.constant 11 : index
    %100 = vector.load %arg2[%c0_55, %c0_56, %c11] : memref<1x8x32xf32, #tpu.memory_space<vmem>>, vector<1x8x1xf32>
    %101 = vector.shape_cast %100 : vector<1x8x1xf32> to vector<8x1xf32>
    %c0_57 = arith.constant 0 : index
    %c11_58 = arith.constant 11 : index
    %c0_59 = arith.constant 0 : index
    %102 = vector.load %arg3[%c0_57, %c11_58, %c0_59] : memref<1x32x128xf32, #tpu.memory_space<vmem>>, vector<1x1x128xf32>
    %103 = vector.shape_cast %102 : vector<1x1x128xf32> to vector<1x128xf32>
    %104 = vector.broadcast %101 : vector<8x1xf32> to vector<8x128xf32>
    %105 = vector.broadcast %103 : vector<1x128xf32> to vector<8x128xf32>
    %106 = arith.subf %104, %105 : vector<8x128xf32>
    %107 = math.absf %106 : vector<8x128xf32>
    %108 = arith.addf %99, %107 : vector<8x128xf32>
    %c0_60 = arith.constant 0 : index
    %c0_61 = arith.constant 0 : index
    %c12 = arith.constant 12 : index
    %109 = vector.load %arg2[%c0_60, %c0_61, %c12] : memref<1x8x32xf32, #tpu.memory_space<vmem>>, vector<1x8x1xf32>
    %110 = vector.shape_cast %109 : vector<1x8x1xf32> to vector<8x1xf32>
    %c0_62 = arith.constant 0 : index
    %c12_63 = arith.constant 12 : index
    %c0_64 = arith.constant 0 : index
    %111 = vector.load %arg3[%c0_62, %c12_63, %c0_64] : memref<1x32x128xf32, #tpu.memory_space<vmem>>, vector<1x1x128xf32>
    %112 = vector.shape_cast %111 : vector<1x1x128xf32> to vector<1x128xf32>
    %113 = vector.broadcast %110 : vector<8x1xf32> to vector<8x128xf32>
    %114 = vector.broadcast %112 : vector<1x128xf32> to vector<8x128xf32>
    %115 = arith.subf %113, %114 : vector<8x128xf32>
    %116 = math.absf %115 : vector<8x128xf32>
    %117 = arith.subf %108, %116 : vector<8x128xf32>
    %c0_65 = arith.constant 0 : index
    %c0_66 = arith.constant 0 : index
    %c13 = arith.constant 13 : index
    %118 = vector.load %arg2[%c0_65, %c0_66, %c13] : memref<1x8x32xf32, #tpu.memory_space<vmem>>, vector<1x8x1xf32>
    %119 = vector.shape_cast %118 : vector<1x8x1xf32> to vector<8x1xf32>
    %c0_67 = arith.constant 0 : index
    %c13_68 = arith.constant 13 : index
    %c0_69 = arith.constant 0 : index
    %120 = vector.load %arg3[%c0_67, %c13_68, %c0_69] : memref<1x32x128xf32, #tpu.memory_space<vmem>>, vector<1x1x128xf32>
    %121 = vector.shape_cast %120 : vector<1x1x128xf32> to vector<1x128xf32>
    %122 = vector.broadcast %119 : vector<8x1xf32> to vector<8x128xf32>
    %123 = vector.broadcast %121 : vector<1x128xf32> to vector<8x128xf32>
    %124 = arith.subf %122, %123 : vector<8x128xf32>
    %125 = math.absf %124 : vector<8x128xf32>
    %126 = arith.subf %117, %125 : vector<8x128xf32>
    %c0_70 = arith.constant 0 : index
    %c0_71 = arith.constant 0 : index
    %c14 = arith.constant 14 : index
    %127 = vector.load %arg2[%c0_70, %c0_71, %c14] : memref<1x8x32xf32, #tpu.memory_space<vmem>>, vector<1x8x1xf32>
    %128 = vector.shape_cast %127 : vector<1x8x1xf32> to vector<8x1xf32>
    %c0_72 = arith.constant 0 : index
    %c14_73 = arith.constant 14 : index
    %c0_74 = arith.constant 0 : index
    %129 = vector.load %arg3[%c0_72, %c14_73, %c0_74] : memref<1x32x128xf32, #tpu.memory_space<vmem>>, vector<1x1x128xf32>
    %130 = vector.shape_cast %129 : vector<1x1x128xf32> to vector<1x128xf32>
    %131 = vector.broadcast %128 : vector<8x1xf32> to vector<8x128xf32>
    %132 = vector.broadcast %130 : vector<1x128xf32> to vector<8x128xf32>
    %133 = arith.subf %131, %132 : vector<8x128xf32>
    %134 = math.absf %133 : vector<8x128xf32>
    %135 = arith.addf %126, %134 : vector<8x128xf32>
    %c0_75 = arith.constant 0 : index
    %c0_76 = arith.constant 0 : index
    %c15 = arith.constant 15 : index
    %136 = vector.load %arg2[%c0_75, %c0_76, %c15] : memref<1x8x32xf32, #tpu.memory_space<vmem>>, vector<1x8x1xf32>
    %137 = vector.shape_cast %136 : vector<1x8x1xf32> to vector<8x1xf32>
    %c0_77 = arith.constant 0 : index
    %c15_78 = arith.constant 15 : index
    %c0_79 = arith.constant 0 : index
    %138 = vector.load %arg3[%c0_77, %c15_78, %c0_79] : memref<1x32x128xf32, #tpu.memory_space<vmem>>, vector<1x1x128xf32>
    %139 = vector.shape_cast %138 : vector<1x1x128xf32> to vector<1x128xf32>
    %140 = vector.broadcast %137 : vector<8x1xf32> to vector<8x128xf32>
    %141 = vector.broadcast %139 : vector<1x128xf32> to vector<8x128xf32>
    %142 = arith.subf %140, %141 : vector<8x128xf32>
    %143 = math.absf %142 : vector<8x128xf32>
    %144 = arith.addf %135, %143 : vector<8x128xf32>
    %c0_80 = arith.constant 0 : index
    %c0_81 = arith.constant 0 : index
    %c16 = arith.constant 16 : index
    %145 = vector.load %arg2[%c0_80, %c0_81, %c16] : memref<1x8x32xf32, #tpu.memory_space<vmem>>, vector<1x8x1xf32>
    %146 = vector.shape_cast %145 : vector<1x8x1xf32> to vector<8x1xf32>
    %c0_82 = arith.constant 0 : index
    %c16_83 = arith.constant 16 : index
    %c0_84 = arith.constant 0 : index
    %147 = vector.load %arg3[%c0_82, %c16_83, %c0_84] : memref<1x32x128xf32, #tpu.memory_space<vmem>>, vector<1x1x128xf32>
    %148 = vector.shape_cast %147 : vector<1x1x128xf32> to vector<1x128xf32>
    %149 = vector.broadcast %146 : vector<8x1xf32> to vector<8x128xf32>
    %150 = vector.broadcast %148 : vector<1x128xf32> to vector<8x128xf32>
    %151 = arith.subf %149, %150 : vector<8x128xf32>
    %152 = math.absf %151 : vector<8x128xf32>
    %153 = arith.subf %144, %152 : vector<8x128xf32>
    %c0_85 = arith.constant 0 : index
    %c0_86 = arith.constant 0 : index
    %c17 = arith.constant 17 : index
    %154 = vector.load %arg2[%c0_85, %c0_86, %c17] : memref<1x8x32xf32, #tpu.memory_space<vmem>>, vector<1x8x1xf32>
    %155 = vector.shape_cast %154 : vector<1x8x1xf32> to vector<8x1xf32>
    %c0_87 = arith.constant 0 : index
    %c17_88 = arith.constant 17 : index
    %c0_89 = arith.constant 0 : index
    %156 = vector.load %arg3[%c0_87, %c17_88, %c0_89] : memref<1x32x128xf32, #tpu.memory_space<vmem>>, vector<1x1x128xf32>
    %157 = vector.shape_cast %156 : vector<1x1x128xf32> to vector<1x128xf32>
    %158 = vector.broadcast %155 : vector<8x1xf32> to vector<8x128xf32>
    %159 = vector.broadcast %157 : vector<1x128xf32> to vector<8x128xf32>
    %160 = arith.subf %158, %159 : vector<8x128xf32>
    %161 = math.absf %160 : vector<8x128xf32>
    %162 = arith.subf %153, %161 : vector<8x128xf32>
    %c0_90 = arith.constant 0 : index
    %c0_91 = arith.constant 0 : index
    %c18 = arith.constant 18 : index
    %163 = vector.load %arg2[%c0_90, %c0_91, %c18] : memref<1x8x32xf32, #tpu.memory_space<vmem>>, vector<1x8x1xf32>
    %164 = vector.shape_cast %163 : vector<1x8x1xf32> to vector<8x1xf32>
    %c0_92 = arith.constant 0 : index
    %c18_93 = arith.constant 18 : index
    %c0_94 = arith.constant 0 : index
    %165 = vector.load %arg3[%c0_92, %c18_93, %c0_94] : memref<1x32x128xf32, #tpu.memory_space<vmem>>, vector<1x1x128xf32>
    %166 = vector.shape_cast %165 : vector<1x1x128xf32> to vector<1x128xf32>
    %167 = vector.broadcast %164 : vector<8x1xf32> to vector<8x128xf32>
    %168 = vector.broadcast %166 : vector<1x128xf32> to vector<8x128xf32>
    %169 = arith.subf %167, %168 : vector<8x128xf32>
    %170 = math.absf %169 : vector<8x128xf32>
    %171 = arith.addf %162, %170 : vector<8x128xf32>
    %c0_95 = arith.constant 0 : index
    %c0_96 = arith.constant 0 : index
    %c19 = arith.constant 19 : index
    %172 = vector.load %arg2[%c0_95, %c0_96, %c19] : memref<1x8x32xf32, #tpu.memory_space<vmem>>, vector<1x8x1xf32>
    %173 = vector.shape_cast %172 : vector<1x8x1xf32> to vector<8x1xf32>
    %c0_97 = arith.constant 0 : index
    %c19_98 = arith.constant 19 : index
    %c0_99 = arith.constant 0 : index
    %174 = vector.load %arg3[%c0_97, %c19_98, %c0_99] : memref<1x32x128xf32, #tpu.memory_space<vmem>>, vector<1x1x128xf32>
    %175 = vector.shape_cast %174 : vector<1x1x128xf32> to vector<1x128xf32>
    %176 = vector.broadcast %173 : vector<8x1xf32> to vector<8x128xf32>
    %177 = vector.broadcast %175 : vector<1x128xf32> to vector<8x128xf32>
    %178 = arith.subf %176, %177 : vector<8x128xf32>
    %179 = math.absf %178 : vector<8x128xf32>
    %180 = arith.addf %171, %179 : vector<8x128xf32>
    %c0_100 = arith.constant 0 : index
    %c0_101 = arith.constant 0 : index
    %c20 = arith.constant 20 : index
    %181 = vector.load %arg2[%c0_100, %c0_101, %c20] : memref<1x8x32xf32, #tpu.memory_space<vmem>>, vector<1x8x1xf32>
    %182 = vector.shape_cast %181 : vector<1x8x1xf32> to vector<8x1xf32>
    %c0_102 = arith.constant 0 : index
    %c20_103 = arith.constant 20 : index
    %c0_104 = arith.constant 0 : index
    %183 = vector.load %arg3[%c0_102, %c20_103, %c0_104] : memref<1x32x128xf32, #tpu.memory_space<vmem>>, vector<1x1x128xf32>
    %184 = vector.shape_cast %183 : vector<1x1x128xf32> to vector<1x128xf32>
    %185 = vector.broadcast %182 : vector<8x1xf32> to vector<8x128xf32>
    %186 = vector.broadcast %184 : vector<1x128xf32> to vector<8x128xf32>
    %187 = arith.subf %185, %186 : vector<8x128xf32>
    %188 = math.absf %187 : vector<8x128xf32>
    %189 = arith.subf %180, %188 : vector<8x128xf32>
    %c0_105 = arith.constant 0 : index
    %c0_106 = arith.constant 0 : index
    %c21 = arith.constant 21 : index
    %190 = vector.load %arg2[%c0_105, %c0_106, %c21] : memref<1x8x32xf32, #tpu.memory_space<vmem>>, vector<1x8x1xf32>
    %191 = vector.shape_cast %190 : vector<1x8x1xf32> to vector<8x1xf32>
    %c0_107 = arith.constant 0 : index
    %c21_108 = arith.constant 21 : index
    %c0_109 = arith.constant 0 : index
    %192 = vector.load %arg3[%c0_107, %c21_108, %c0_109] : memref<1x32x128xf32, #tpu.memory_space<vmem>>, vector<1x1x128xf32>
    %193 = vector.shape_cast %192 : vector<1x1x128xf32> to vector<1x128xf32>
    %194 = vector.broadcast %191 : vector<8x1xf32> to vector<8x128xf32>
    %195 = vector.broadcast %193 : vector<1x128xf32> to vector<8x128xf32>
    %196 = arith.subf %194, %195 : vector<8x128xf32>
    %197 = math.absf %196 : vector<8x128xf32>
    %198 = arith.subf %189, %197 : vector<8x128xf32>
    %c0_110 = arith.constant 0 : index
    %c0_111 = arith.constant 0 : index
    %c22 = arith.constant 22 : index
    %199 = vector.load %arg2[%c0_110, %c0_111, %c22] : memref<1x8x32xf32, #tpu.memory_space<vmem>>, vector<1x8x1xf32>
    %200 = vector.shape_cast %199 : vector<1x8x1xf32> to vector<8x1xf32>
    %c0_112 = arith.constant 0 : index
    %c22_113 = arith.constant 22 : index
    %c0_114 = arith.constant 0 : index
    %201 = vector.load %arg3[%c0_112, %c22_113, %c0_114] : memref<1x32x128xf32, #tpu.memory_space<vmem>>, vector<1x1x128xf32>
    %202 = vector.shape_cast %201 : vector<1x1x128xf32> to vector<1x128xf32>
    %203 = vector.broadcast %200 : vector<8x1xf32> to vector<8x128xf32>
    %204 = vector.broadcast %202 : vector<1x128xf32> to vector<8x128xf32>
    %205 = arith.subf %203, %204 : vector<8x128xf32>
    %206 = math.absf %205 : vector<8x128xf32>
    %207 = arith.subf %198, %206 : vector<8x128xf32>
    %c0_115 = arith.constant 0 : index
    %c0_116 = arith.constant 0 : index
    %c23 = arith.constant 23 : index
    %208 = vector.load %arg2[%c0_115, %c0_116, %c23] : memref<1x8x32xf32, #tpu.memory_space<vmem>>, vector<1x8x1xf32>
    %209 = vector.shape_cast %208 : vector<1x8x1xf32> to vector<8x1xf32>
    %c0_117 = arith.constant 0 : index
    %c23_118 = arith.constant 23 : index
    %c0_119 = arith.constant 0 : index
    %210 = vector.load %arg3[%c0_117, %c23_118, %c0_119] : memref<1x32x128xf32, #tpu.memory_space<vmem>>, vector<1x1x128xf32>
    %211 = vector.shape_cast %210 : vector<1x1x128xf32> to vector<1x128xf32>
    %212 = vector.broadcast %209 : vector<8x1xf32> to vector<8x128xf32>
    %213 = vector.broadcast %211 : vector<1x128xf32> to vector<8x128xf32>
    %214 = arith.subf %212, %213 : vector<8x128xf32>
    %215 = math.absf %214 : vector<8x128xf32>
    %216 = arith.addf %207, %215 : vector<8x128xf32>
    %c0_120 = arith.constant 0 : index
    %c0_121 = arith.constant 0 : index
    %c24 = arith.constant 24 : index
    %217 = vector.load %arg2[%c0_120, %c0_121, %c24] : memref<1x8x32xf32, #tpu.memory_space<vmem>>, vector<1x8x1xf32>
    %218 = vector.shape_cast %217 : vector<1x8x1xf32> to vector<8x1xf32>
    %c0_122 = arith.constant 0 : index
    %c24_123 = arith.constant 24 : index
    %c0_124 = arith.constant 0 : index
    %219 = vector.load %arg3[%c0_122, %c24_123, %c0_124] : memref<1x32x128xf32, #tpu.memory_space<vmem>>, vector<1x1x128xf32>
    %220 = vector.shape_cast %219 : vector<1x1x128xf32> to vector<1x128xf32>
    %221 = vector.broadcast %218 : vector<8x1xf32> to vector<8x128xf32>
    %222 = vector.broadcast %220 : vector<1x128xf32> to vector<8x128xf32>
    %223 = arith.subf %221, %222 : vector<8x128xf32>
    %224 = math.absf %223 : vector<8x128xf32>
    %225 = arith.subf %216, %224 : vector<8x128xf32>
    %c0_125 = arith.constant 0 : index
    %c0_126 = arith.constant 0 : index
    %c25 = arith.constant 25 : index
    %226 = vector.load %arg2[%c0_125, %c0_126, %c25] : memref<1x8x32xf32, #tpu.memory_space<vmem>>, vector<1x8x1xf32>
    %227 = vector.shape_cast %226 : vector<1x8x1xf32> to vector<8x1xf32>
    %c0_127 = arith.constant 0 : index
    %c25_128 = arith.constant 25 : index
    %c0_129 = arith.constant 0 : index
    %228 = vector.load %arg3[%c0_127, %c25_128, %c0_129] : memref<1x32x128xf32, #tpu.memory_space<vmem>>, vector<1x1x128xf32>
    %229 = vector.shape_cast %228 : vector<1x1x128xf32> to vector<1x128xf32>
    %230 = vector.broadcast %227 : vector<8x1xf32> to vector<8x128xf32>
    %231 = vector.broadcast %229 : vector<1x128xf32> to vector<8x128xf32>
    %232 = arith.subf %230, %231 : vector<8x128xf32>
    %233 = math.absf %232 : vector<8x128xf32>
    %234 = arith.addf %225, %233 : vector<8x128xf32>
    %c0_130 = arith.constant 0 : index
    %c0_131 = arith.constant 0 : index
    %c26 = arith.constant 26 : index
    %235 = vector.load %arg2[%c0_130, %c0_131, %c26] : memref<1x8x32xf32, #tpu.memory_space<vmem>>, vector<1x8x1xf32>
    %236 = vector.shape_cast %235 : vector<1x8x1xf32> to vector<8x1xf32>
    %c0_132 = arith.constant 0 : index
    %c26_133 = arith.constant 26 : index
    %c0_134 = arith.constant 0 : index
    %237 = vector.load %arg3[%c0_132, %c26_133, %c0_134] : memref<1x32x128xf32, #tpu.memory_space<vmem>>, vector<1x1x128xf32>
    %238 = vector.shape_cast %237 : vector<1x1x128xf32> to vector<1x128xf32>
    %239 = vector.broadcast %236 : vector<8x1xf32> to vector<8x128xf32>
    %240 = vector.broadcast %238 : vector<1x128xf32> to vector<8x128xf32>
    %241 = arith.subf %239, %240 : vector<8x128xf32>
    %242 = math.absf %241 : vector<8x128xf32>
    %243 = arith.subf %234, %242 : vector<8x128xf32>
    %c0_135 = arith.constant 0 : index
    %c0_136 = arith.constant 0 : index
    %c27 = arith.constant 27 : index
    %244 = vector.load %arg2[%c0_135, %c0_136, %c27] : memref<1x8x32xf32, #tpu.memory_space<vmem>>, vector<1x8x1xf32>
    %245 = vector.shape_cast %244 : vector<1x8x1xf32> to vector<8x1xf32>
    %c0_137 = arith.constant 0 : index
    %c27_138 = arith.constant 27 : index
    %c0_139 = arith.constant 0 : index
    %246 = vector.load %arg3[%c0_137, %c27_138, %c0_139] : memref<1x32x128xf32, #tpu.memory_space<vmem>>, vector<1x1x128xf32>
    %247 = vector.shape_cast %246 : vector<1x1x128xf32> to vector<1x128xf32>
    %248 = vector.broadcast %245 : vector<8x1xf32> to vector<8x128xf32>
    %249 = vector.broadcast %247 : vector<1x128xf32> to vector<8x128xf32>
    %250 = arith.subf %248, %249 : vector<8x128xf32>
    %251 = math.absf %250 : vector<8x128xf32>
    %252 = arith.addf %243, %251 : vector<8x128xf32>
    %c0_140 = arith.constant 0 : index
    %c0_141 = arith.constant 0 : index
    %c28 = arith.constant 28 : index
    %253 = vector.load %arg2[%c0_140, %c0_141, %c28] : memref<1x8x32xf32, #tpu.memory_space<vmem>>, vector<1x8x1xf32>
    %254 = vector.shape_cast %253 : vector<1x8x1xf32> to vector<8x1xf32>
    %c0_142 = arith.constant 0 : index
    %c28_143 = arith.constant 28 : index
    %c0_144 = arith.constant 0 : index
    %255 = vector.load %arg3[%c0_142, %c28_143, %c0_144] : memref<1x32x128xf32, #tpu.memory_space<vmem>>, vector<1x1x128xf32>
    %256 = vector.shape_cast %255 : vector<1x1x128xf32> to vector<1x128xf32>
    %257 = vector.broadcast %254 : vector<8x1xf32> to vector<8x128xf32>
    %258 = vector.broadcast %256 : vector<1x128xf32> to vector<8x128xf32>
    %259 = arith.subf %257, %258 : vector<8x128xf32>
    %260 = math.absf %259 : vector<8x128xf32>
    %261 = arith.addf %252, %260 : vector<8x128xf32>
    %c0_145 = arith.constant 0 : index
    %c0_146 = arith.constant 0 : index
    %c29 = arith.constant 29 : index
    %262 = vector.load %arg2[%c0_145, %c0_146, %c29] : memref<1x8x32xf32, #tpu.memory_space<vmem>>, vector<1x8x1xf32>
    %263 = vector.shape_cast %262 : vector<1x8x1xf32> to vector<8x1xf32>
    %c0_147 = arith.constant 0 : index
    %c29_148 = arith.constant 29 : index
    %c0_149 = arith.constant 0 : index
    %264 = vector.load %arg3[%c0_147, %c29_148, %c0_149] : memref<1x32x128xf32, #tpu.memory_space<vmem>>, vector<1x1x128xf32>
    %265 = vector.shape_cast %264 : vector<1x1x128xf32> to vector<1x128xf32>
    %266 = vector.broadcast %263 : vector<8x1xf32> to vector<8x128xf32>
    %267 = vector.broadcast %265 : vector<1x128xf32> to vector<8x128xf32>
    %268 = arith.subf %266, %267 : vector<8x128xf32>
    %269 = math.absf %268 : vector<8x128xf32>
    %270 = arith.subf %261, %269 : vector<8x128xf32>
    %c0_150 = arith.constant 0 : index
    %c0_151 = arith.constant 0 : index
    %c30 = arith.constant 30 : index
    %271 = vector.load %arg2[%c0_150, %c0_151, %c30] : memref<1x8x32xf32, #tpu.memory_space<vmem>>, vector<1x8x1xf32>
    %272 = vector.shape_cast %271 : vector<1x8x1xf32> to vector<8x1xf32>
    %c0_152 = arith.constant 0 : index
    %c30_153 = arith.constant 30 : index
    %c0_154 = arith.constant 0 : index
    %273 = vector.load %arg3[%c0_152, %c30_153, %c0_154] : memref<1x32x128xf32, #tpu.memory_space<vmem>>, vector<1x1x128xf32>
    %274 = vector.shape_cast %273 : vector<1x1x128xf32> to vector<1x128xf32>
    %275 = vector.broadcast %272 : vector<8x1xf32> to vector<8x128xf32>
    %276 = vector.broadcast %274 : vector<1x128xf32> to vector<8x128xf32>
    %277 = arith.subf %275, %276 : vector<8x128xf32>
    %278 = math.absf %277 : vector<8x128xf32>
    %279 = arith.subf %270, %278 : vector<8x128xf32>
    %c0_155 = arith.constant 0 : index
    %c0_156 = arith.constant 0 : index
    %c31 = arith.constant 31 : index
    %280 = vector.load %arg2[%c0_155, %c0_156, %c31] : memref<1x8x32xf32, #tpu.memory_space<vmem>>, vector<1x8x1xf32>
    %281 = vector.shape_cast %280 : vector<1x8x1xf32> to vector<8x1xf32>
    %c0_157 = arith.constant 0 : index
    %c31_158 = arith.constant 31 : index
    %c0_159 = arith.constant 0 : index
    %282 = vector.load %arg3[%c0_157, %c31_158, %c0_159] : memref<1x32x128xf32, #tpu.memory_space<vmem>>, vector<1x1x128xf32>
    %283 = vector.shape_cast %282 : vector<1x1x128xf32> to vector<1x128xf32>
    %284 = vector.broadcast %281 : vector<8x1xf32> to vector<8x128xf32>
    %285 = vector.broadcast %283 : vector<1x128xf32> to vector<8x128xf32>
    %286 = arith.subf %284, %285 : vector<8x128xf32>
    %287 = math.absf %286 : vector<8x128xf32>
    %288 = arith.subf %279, %287 : vector<8x128xf32>
    %c8_i32 = arith.constant 8 : i32
    %289 = arith.muli %arg1, %c8_i32 : i32
    %290 = tpu.iota {dimensions = array<i32: 0>} : vector<8x128xi32>
    %291 = vector.broadcast %289 : i32 to vector<8x128xi32>
    %292 = arith.addi %291, %290 : vector<8x128xi32>
    %293 = tpu.iota {dimensions = array<i32: 1>} : vector<8x128xi32>
    %294 = arith.cmpi eq, %292, %293 : vector<8x128xi32>
    %cst_160 = arith.constant -1.000000e+08 : f32
    %295 = vector.broadcast %cst_160 : f32 to vector<8x128xf32>
    %296 = arith.select %294, %295, %288 : vector<8x128xi1>, vector<8x128xf32>
    %c8_i32_161 = arith.constant 8 : i32
    %297 = vector.broadcast %c8_i32_161 : i32 to vector<8x128xi32>
    %298 = arith.cmpi sge, %293, %297 : vector<8x128xi32>
    %cst_162 = arith.constant 0xFF800000 : f32
    %299 = vector.broadcast %cst_162 : f32 to vector<8x128xf32>
    %300 = arith.select %298, %299, %296 : vector<8x128xi1>, vector<8x128xf32>
    %cst_163 = arith.constant dense<0xFF800000> : vector<8xf32>
    %301 = vector.multi_reduction <maximumf>, %300, %cst_163 [1] : vector<8x128xf32> to vector<8xf32>
    %302 = vector.shape_cast %301 : vector<8xf32> to vector<8x1xf32>
    %303 = vector.broadcast %302 : vector<8x1xf32> to vector<8x128xf32>
    %304 = arith.subf %300, %303 : vector<8x128xf32>
    %305 = math.exp %304 : vector<8x128xf32>
    %cst_164 = arith.constant dense<0.000000e+00> : vector<8xf32>
    %306 = vector.multi_reduction <add>, %305, %cst_164 [1] : vector<8x128xf32> to vector<8xf32>
    %307 = vector.shape_cast %306 : vector<8xf32> to vector<8x1xf32>
    %308 = tpu.reciprocal %307 {approx = true} : vector<8x1xf32> -> vector<8x1xf32>
    %309 = vector.broadcast %308 : vector<8x1xf32> to vector<8x128xf32>
    %310 = arith.mulf %305, %309 : vector<8x128xf32>
    %c0_165 = arith.constant 0 : index
    %c0_166 = arith.constant 0 : index
    %c0_167 = arith.constant 0 : index
    %311 = vector.load %arg5[%c0_165, %c0_166, %c0_167] : memref<1x8x128xf32, #tpu.memory_space<vmem>>, vector<1x8x128xf32>
    %312 = vector.shape_cast %311 : vector<1x8x128xf32> to vector<8x128xf32>
    %313 = vector.shape_cast %310 : vector<8x128xf32> to vector<1x8x128xf32>
    tpu.vector_store %arg5[%c0_165, %c0_166, %c0_167], %313 {strides = array<i32>} : memref<1x8x128xf32, #tpu.memory_space<vmem>>, vector<1x8x128xf32>,
    return
  }
  func.func @transform_0(%arg0: i32, %arg1: i32) -> (i32, i32, i32) {
    %c0_i32 = arith.constant 0 : i32
    %c0_i32_0 = arith.constant 0 : i32
    return %arg0, %arg1, %c0_i32 : i32, i32, i32
  }
  func.func @transform_1(%arg0: i32, %arg1: i32) -> (i32, i32, i32) {
    %c0_i32 = arith.constant 0 : i32
    %c0_i32_0 = arith.constant 0 : i32
    %c0_i32_1 = arith.constant 0 : i32
    return %arg0, %c0_i32, %c0_i32_0 : i32, i32, i32
  }
  func.func @transform_2(%arg0: i32, %arg1: i32) -> i32 {
    %c0_i32 = arith.constant 0 : i32
    %c0_i32_0 = arith.constant 0 : i32
    return %c0_i32 : i32
  }
  func.func @transform_3(%arg0: i32, %arg1: i32) -> (i32, i32, i32) {
    %c0_i32 = arith.constant 0 : i32
    %c0_i32_0 = arith.constant 0 : i32
    return %arg0, %arg1, %c0_i32 : i32, i32, i32
  }
}

</mosaic_0001>

<llo_original>
// kernel: tpu_custom_call.1
$region0: #{tpu_custom_call.1}
  #allocation0 [shape = 'u32[]', space=smem, size = 0x4, offset = 0x4, fixed_abs, tag = 'smem constant byte address 0x4 - core index']
  #allocation1 [shape = 'u32[72,128]{1,0:T(1,128)}', space=vmem, size = 0x9000, scoped, tag = 'internal scratch']
  %s0 = inlined_call_operand.hbm [shape: f32[2,8,32], index: 0, kind: input, shape index: {}]
  %s1 = inlined_call_operand.hbm [shape: f32[2,32,128], index: 1, kind: input, shape index: {}]
  %s2 = inlined_call_operand.vmem [shape: f32[32], index: 2, kind: input, shape index: {}]
  %s3 = inlined_call_operand.hbm [shape: f32[2,8,128], index: 3, kind: output, shape index: {}]
  %s4 = sld [smem:[#allocation0]]
  $region57: #{tpu_custom_call.1} parent=0
    _
  %s6 = ssub.s32 1, %s4
  %s7 = scalar_select 0, %s6, %s4
  $region1: #{tpu_custom_call.1} parent=0
    #allocation2 [shape = 'u8[8192]{0}', space=vmem, size = 0x2000, scoped, tag = 'input window, operand 0']
    #allocation3 [shape = 's32[2]{0}', space=sflag, size = 0x8, scoped, tag = 'scoped memory for tpu_custom_call.1']
    #allocation4 [shape = 's32[2]{0}', space=sflag, size = 0x8, scoped, tag = 'scoped memory for tpu_custom_call.1']
    #allocation5 [shape = 's32[2]{0}', space=sflag, size = 0x8, scoped, tag = 'scoped memory for tpu_custom_call.1']
    #allocation6 [shape = 'u8[32768]{0}', space=vmem, size = 0x8000, scoped, tag = 'input window, operand 1']
    #allocation7 [shape = 's32[2]{0}', space=sflag, size = 0x8, scoped, tag = 'scoped memory for tpu_custom_call.1']
    #allocation8 [shape = 'u8[512]{0}', space=smem, size = 0x200, scoped, tag = 'input window, operand 2, single buffered']
    #allocation9 [shape = 'u8[8192]{0}', space=vmem, size = 0x2000, scoped, tag = 'output window, operand 0']
    %8 = vsyncpa [#allocation3], 0
    %s9 = scalar_lea.sflag [#allocation3], 1
    %10 = vsyncpa %s9, 0
    %11 = vsyncpa [#allocation7], 0
    %s12 = scalar_lea.sflag [#allocation7], 1
    %13 = vsyncpa %s12, 0
    %14 = vsyncpa [#allocation5], 0
    %15 = vsyncpa [#allocation4], 0
    %s16 = scalar_lea.sflag [#allocation4], 1
    %17 = vsyncpa %s16, 0
    loop: start=0, step=1, limit=4
    $region2: #{tpu_custom_call.1} parent=1 // loop_pre_header
      _
    $region3: #{tpu_custom_call.1} parent=1 // loop_header
      %s19 = sphi 0, %s23
      %p20 = scmp.ge.s32.totalorder %s19, 4
      %s26 = sphi 0, %s38
      %s27 = sphi 0, %s34
      %s28 = sphi 0, %s26
      %s29 = sphi 0, %s27
      %s30 = sphi 0, %s28
      %s31 = sphi 0, %s29
      %s43 = sphi 0, %s45
      %s46 = sphi 0, %s43
      %s47 = sphi 0, %s46
      %s63 = sphi 0, %s47
      %s69 = sphi 0, %s71
      %s72 = sphi 0, %s69
      %s73 = sphi 0, %s72
      %s89 = sphi 0, %s73
      %s93 = sphi 0, %s93
      %s95 = sphi 0, %s93
      %s96 = sphi 0, %s95
      %s110 = sphi 0, %s96
      %s118 = sphi 0, %s120
      %s121 = sphi 0, %s118
      %s122 = sphi 0, %s121
      %s138 = sphi 0, %s122
    $region4: #{tpu_custom_call.1} parent=1 // loop_header_branch
      %22 = sbr.rel (%p20) target = $region8
    $region5: #{tpu_custom_call.1} parent=1 // loop_body
      %s24 = ssub.s32 %s19, 1
      %s25 = ssub.s32 %s19, 2
      %s32 = sadd.s32 1, %s27
      %p33 = scmp.ge.s32.totalorder %s32, 1
      %s34 = scalar_select %p33, 0, %s32
      %s35 = sadd.s32 1, %s26
      %s36 = scalar_select %p33, %s35, %s26
      %p37 = scmp.ge.s32.totalorder %s36, 2
      %s38 = scalar_select %p37, 0, %s36
      %s39 = ssub.s32 %s26, %s38
      %s40 = ssub.s32 %s27, %s34
      %s41 = sor.u32 %s39, %s40
      %p42 = scmp.eq.s32.totalorder %s41, 0
      %s44 = sadd.s32 %s43, 1
      %s45 = scalar_select %p42, %s43, %s44
      %p48 = pneg %p42
      %p49 = scmp.eq.s32.totalorder %s19, 1
      %p50 = por %p48, %p49
      %p51 = scmp.ne.s32.totalorder %s43, %s46
      %p52 = scmp.eq.s32.totalorder %s19, 0
      %p53 = por %p51, %p52
      %p54 = scmp.ne.s32.totalorder %s43, %s46
      %p55 = scmp.eq.s32.totalorder %s24, 1
      %p56 = por %p54, %p55
      %p57 = scmp.ne.s32.totalorder %s46, %s47
      %p58 = scmp.eq.s32.totalorder %s24, 0
      %p59 = por %p57, %p58
      %p60 = scmp.ne.s32.totalorder %s46, %s47
      %p61 = scmp.eq.s32.totalorder %s25, 1
      %p62 = por %p60, %p61
      %p64 = scmp.ne.s32.totalorder %s47, %s63
      %p65 = scmp.eq.s32.totalorder %s25, 0
      %p66 = por %p64, %p65
      %s67 = ssub.s32 %s26, %s38
      %p68 = scmp.eq.s32.totalorder %s67, 0
      %s70 = sadd.s32 %s69, 1
      %s71 = scalar_select %p68, %s69, %s70
      %p74 = pneg %p68
      %p75 = scmp.eq.s32.totalorder %s19, 1
      %p76 = por %p74, %p75
      %p77 = scmp.ne.s32.totalorder %s69, %s72
      %p78 = scmp.eq.s32.totalorder %s19, 0
      %p79 = por %p77, %p78
      %p80 = scmp.ne.s32.totalorder %s69, %s72
      %p81 = scmp.eq.s32.totalorder %s24, 1
      %p82 = por %p80, %p81
      %p83 = scmp.ne.s32.totalorder %s72, %s73
      %p84 = scmp.eq.s32.totalorder %s24, 0
      %p85 = por %p83, %p84
      %p86 = scmp.ne.s32.totalorder %s72, %s73
      %p87 = scmp.eq.s32.totalorder %s25, 1
      %p88 = por %p86, %p87
      %p90 = scmp.ne.s32.totalorder %s73, %s89
      %p91 = scmp.eq.s32.totalorder %s25, 0
      %p92 = por %p90, %p91
      %s94 = sadd.s32 %s93, 1
      %p97 = scmp.eq.s32.totalorder %s19, 1
      %p98 = scmp.ne.s32.totalorder %s93, %s95
      %p99 = scmp.eq.s32.totalorder %s19, 0
      %p100 = por %p98, %p99
      %p101 = scmp.ne.s32.totalorder %s93, %s95
      %p102 = scmp.eq.s32.totalorder %s24, 1
      %p103 = por %p101, %p102
      %p104 = scmp.ne.s32.totalorder %s95, %s96
      %p105 = scmp.eq.s32.totalorder %s24, 0
      %p106 = por %p104, %p105
      %p107 = scmp.ne.s32.totalorder %s95, %s96
      %p108 = scmp.eq.s32.totalorder %s25, 1
      %p109 = por %p107, %p108
      %p111 = scmp.ne.s32.totalorder %s96, %s110
      %p112 = scmp.eq.s32.totalorder %s25, 0
      %p113 = por %p111, %p112
      %s114 = ssub.s32 %s26, %s38
      %s115 = ssub.s32 %s27, %s34
      %s116 = sor.u32 %s114, %s115
      %p117 = scmp.eq.s32.totalorder %s116, 0
      %s119 = sadd.s32 %s118, 1
      %s120 = scalar_select %p117, %s118, %s119
      %p123 = pneg %p117
      %p124 = scmp.eq.s32.totalorder %s19, 1
      %p125 = por %p123, %p124
      %p126 = scmp.ne.s32.totalorder %s118, %s121
      %p127 = scmp.eq.s32.totalorder %s19, 0
      %p128 = por %p126, %p127
      %p129 = scmp.ne.s32.totalorder %s118, %s121
      %p130 = scmp.eq.s32.totalorder %s24, 1
      %p131 = por %p129, %p130
      %p132 = scmp.ne.s32.totalorder %s121, %s122
      %p133 = scmp.eq.s32.totalorder %s24, 0
      %p134 = por %p132, %p133
      %p135 = scmp.ne.s32.totalorder %s121, %s122
      %p136 = scmp.eq.s32.totalorder %s25, 1
      %p137 = por %p135, %p136
      %p139 = scmp.ne.s32.totalorder %s122, %s138
      %p140 = scmp.eq.s32.totalorder %s25, 0
      %p141 = por %p139, %p140
      %p142 = scmp.le.s32.totalorder 1, %s19
      %p143 = scmp.lt.s32.totalorder %s19, 3
      %p144 = pnand %p142, %p143
      %p145 = pneg %p144
      // Predicated region
      $region9: #{tpu_custom_call.1} parent=5 // pred_check
        _
      $region10: #{tpu_custom_call.1} parent=5 // pred_check_branch
        %147 = sbr.rel (%p144) target = $region12
      $region11: #{tpu_custom_call.1} parent=5 // pred_region
        %s148 = ssub.s32 %s19, 1
        // Predicated region
        $region13: #{tpu_custom_call.1} parent=11 // pred_check
          %p149 = pneg %p106
        $region14: #{tpu_custom_call.1} parent=11 // pred_check_branch
          %151 = sbr.rel (%p149) target = $region16
        $region15: #{tpu_custom_call.1} parent=11 // pred_region
          %153 = vsyncadd [#allocation5], 0
          %s155 = sshll.u32 %s2, 4
          %s156 = int_to_ptr.vmem [resolvable:$true] %s155
          %158 = dma.vmem_to_smem %s156, 16, [#allocation8], [#allocation5]
        $region16: #{tpu_custom_call.1} parent=11 // pred_fallthru
          _
      $region12: #{tpu_custom_call.1} parent=5 // pred_fallthru
        _
      %p159 = scmp.lt.s32.totalorder %s19, 2
      // Predicated region
      $region17: #{tpu_custom_call.1} parent=5 // pred_check
        %p160 = pneg %p159
      $region18: #{tpu_custom_call.1} parent=5 // pred_check_branch
        %162 = sbr.rel (%p160) target = $region20
      $region19: #{tpu_custom_call.1} parent=5 // pred_region
        // Predicated region
        $region21: #{tpu_custom_call.1} parent=19 // pred_check
          %p163 = pneg %p53
        $region22: #{tpu_custom_call.1} parent=19 // pred_check_branch
          %165 = sbr.rel (%p163) target = $region24
        $region23: #{tpu_custom_call.1} parent=19 // pred_region
          %s166 = sand.u32 %s43, 1
          %s167 = scalar_lea.sflag [#allocation3], %s166
          %s168 = sand.u32 %s43, 1
          %s169 = smul.addr %s168, 8
          %s170 = scalar_lea.vmem [#allocation2], %s169
          %172 = vsyncadd %s167, 0
          %s173 = sadd.s32 %s27, %s26
          %s174 = smul.addr %s173, 8
          %s175 = scalar_lea.hbm %s0, %s174
          %s177 = sshll.u32 %s175, 4
          %s178 = int_to_ptr.hbm [resolvable:$true] %s177
          %s179 = sshll.u32 %s170, 4
          %s180 = int_to_ptr.vmem [resolvable:$true] %s179
          %182 = dma.hbm_to_vmem [thread:$0]  %s178, 128, %s180, %s167
        $region24: #{tpu_custom_call.1} parent=19 // pred_fallthru
          _
        // Predicated region
        $region25: #{tpu_custom_call.1} parent=19 // pred_check
          %p183 = pneg %p79
        $region26: #{tpu_custom_call.1} parent=19 // pred_check_branch
          %185 = sbr.rel (%p183) target = $region28
        $region27: #{tpu_custom_call.1} parent=19 // pred_region
          %s186 = sand.u32 %s69, 1
          %s187 = scalar_lea.sflag [#allocation7], %s186
          %s188 = sand.u32 %s69, 1
          %s189 = smul.addr %s188, 32
          %s190 = scalar_lea.vmem [#allocation6], %s189
          %192 = vsyncadd %s187, 0
          %s193 = smul.addr %s26, 4
          %s194 = smul.addr %s193, 8
          %s195 = scalar_lea.hbm %s1, %s194
          %s196 = sshll.u32 %s195, 4
          %s197 = int_to_ptr.hbm [resolvable:$true] %s196
          %s198 = sshll.u32 %s190, 4
          %s199 = int_to_ptr.vmem [resolvable:$true] %s198
          %204 = dma.hbm_to_vmem [thread:$0]  %s197, 512, %s199, %s187, 128, 128, 8
        $region28: #{tpu_custom_call.1} parent=19 // pred_fallthru
          _
      $region20: #{tpu_custom_call.1} parent=5 // pred_fallthru
        _
      %p205 = scmp.le.s32.totalorder 1, %s19
      %p206 = scmp.lt.s32.totalorder %s19, 3
      %p207 = pnand %p205, %p206
      %p208 = pneg %p207
      // Predicated region
      $region29: #{tpu_custom_call.1} parent=5 // pred_check
        _
      $region30: #{tpu_custom_call.1} parent=5 // pred_check_branch
        %210 = sbr.rel (%p207) target = $region32
      $region31: #{tpu_custom_call.1} parent=5 // pred_region
        %s211 = ssub.s32 %s19, 1
        %s212 = sand.u32 %s46, 1
        %s213 = scalar_lea.sflag [#allocation3], %s212
        %s214 = sand.u32 %s46, 1
        %s215 = smul.addr %s214, 8
        %s216 = scalar_lea.vmem [#allocation2], %s215
        // Predicated region
        $region33: #{tpu_custom_call.1} parent=31 // pred_check
          %p217 = pneg %p59
        $region34: #{tpu_custom_call.1} parent=31 // pred_check_branch
          %219 = sbr.rel (%p217) target = $region36
        $region35: #{tpu_custom_call.1} parent=31 // pred_region
          %221 = dma.done %s213, 128
        $region36: #{tpu_custom_call.1} parent=31 // pred_fallthru
          _
        %s222 = sand.u32 %s72, 1
        %s223 = scalar_lea.sflag [#allocation7], %s222
        %s224 = sand.u32 %s72, 1
        %s225 = smul.addr %s224, 32
        %s226 = scalar_lea.vmem [#allocation6], %s225
        // Predicated region
        $region37: #{tpu_custom_call.1} parent=31 // pred_check
          %p227 = pneg %p85
        $region38: #{tpu_custom_call.1} parent=31 // pred_check_branch
          %229 = sbr.rel (%p227) target = $region40
        $region39: #{tpu_custom_call.1} parent=31 // pred_region
          %231 = dma.done %s223, 512
        $region40: #{tpu_custom_call.1} parent=31 // pred_fallthru
          _
        // Predicated region
        $region41: #{tpu_custom_call.1} parent=31 // pred_check
          %p232 = pneg %p106
        $region42: #{tpu_custom_call.1} parent=31 // pred_check_branch
          %234 = sbr.rel (%p232) target = $region44
        $region43: #{tpu_custom_call.1} parent=31 // pred_region
          %236 = dma.done [#allocation5], 16
        $region44: #{tpu_custom_call.1} parent=31 // pred_fallthru
          _
        %237 = sfence
        %s238 = sand.u32 %s46, 1
        %s239 = scalar_lea.sflag [#allocation3], %s238
        %s240 = sand.u32 %s46, 1
        %s241 = smul.addr %s240, 8
        %s242 = scalar_lea.vmem [#allocation2], %s241
        %p243 = pneg %p59
        %p244 = pneg %p56
        %s245 = sand.u32 %s72, 1
        %s246 = scalar_lea.sflag [#allocation7], %s245
        %s247 = sand.u32 %s72, 1
        %s248 = smul.addr %s247, 32
        %s249 = scalar_lea.vmem [#allocation6], %s248
        %p250 = pneg %p85
        %p251 = pneg %p82
        %p252 = pneg %p106
        %p253 = pneg %p103
        %p254 = pneg %p134
        %p255 = pneg %p131
        %s256 = sand.u32 %s121, 1
        %s257 = scalar_lea.sflag [#allocation4], %s256
        %s258 = sand.u32 %s121, 1
        %s259 = smul.addr %s258, 8
        %s260 = scalar_lea.vmem [#allocation9], %s259
        %v261 = vld [vmem:[%s216] sm:$0xff]
        %v262 = vld [vmem:[%s226] sm:$0x1]
        %264 = vset.pattern.permute.xlu0 0
        %265 = vperm.xlu0 %264, %v261
        %v266 = vpop.permute.xlu0 %265
        %v268 = vperm.slane %v262, 0
        %v269 = vsub.f32 %v266, %v268
        %v270 = vand.u32 2147483647, %v269
        %v271 = vadd.f32 %v270, 0.0
        %v272 = vld [vmem:[%s226 + $0x1] sm:$0x1]
        %273 = vset.pattern.permute.xlu0 1
        %274 = vperm.xlu0 %273, %v261
        %v275 = vpop.permute.xlu0 %274
        %v277 = vperm.slane %v272, 0
        %v278 = vsub.f32 %v275, %v277
        %v279 = vand.u32 2147483647, %v278
        %v280 = vadd.f32 %v271, %v279
        %v281 = vld [vmem:[%s226 + $0x2] sm:$0x1]
        %282 = vset.pattern.permute.xlu0 2
        %283 = vperm.xlu0 %282, %v261
        %v284 = vpop.permute.xlu0 %283
        %v286 = vperm.slane %v281, 0
        %v287 = vsub.f32 %v284, %v286
        %v288 = vand.u32 2147483647, %v287
        %v289 = vsub.f32 %v280, %v288
        %v290 = vld [vmem:[%s226 + $0x3] sm:$0x1]
        %291 = vset.pattern.permute.xlu0 3
        %292 = vperm.xlu0 %291, %v261
        %v293 = vpop.permute.xlu0 %292
        %v295 = vperm.slane %v290, 0
        %v296 = vsub.f32 %v293, %v295
        %v297 = vand.u32 2147483647, %v296
        %v298 = vsub.f32 %v289, %v297
        %v299 = vld [vmem:[%s226 + $0x4] sm:$0x1]
        %300 = vset.pattern.permute.xlu0 4
        %301 = vperm.xlu0 %300, %v261
        %v302 = vpop.permute.xlu0 %301
        %v304 = vperm.slane %v299, 0
        %v305 = vsub.f32 %v302, %v304
        %v306 = vand.u32 2147483647, %v305
        %v307 = vadd.f32 %v298, %v306
        %v308 = vld [vmem:[%s226 + $0x5] sm:$0x1]
        %309 = vset.pattern.permute.xlu0 5
        %310 = vperm.xlu0 %309, %v261
        %v311 = vpop.permute.xlu0 %310
        %v313 = vperm.slane %v308, 0
        %v314 = vsub.f32 %v311, %v313
        %v315 = vand.u32 2147483647, %v314
        %v316 = vadd.f32 %v307, %v315
        %v317 = vld [vmem:[%s226 + $0x6] sm:$0x1]
        %318 = vset.pattern.permute.xlu0 6
        %319 = vperm.xlu0 %318, %v261
        %v320 = vpop.permute.xlu0 %319
        %v322 = vperm.slane %v317, 0
        %v323 = vsub.f32 %v320, %v322
        %v324 = vand.u32 2147483647, %v323
        %v325 = vadd.f32 %v316, %v324
        %v326 = vld [vmem:[%s226 + $0x7] sm:$0x1]
        %327 = vset.pattern.permute.xlu0 7
        %328 = vperm.xlu0 %327, %v261
        %v329 = vpop.permute.xlu0 %328
        %v331 = vperm.slane %v326, 0
        %v332 = vsub.f32 %v329, %v331
        %v333 = vand.u32 2147483647, %v332
        %v334 = vsub.f32 %v325, %v333
        %v335 = vld [vmem:[%s226 + $0x8] sm:$0x1]
        %336 = vset.pattern.permute.xlu0 8
        %337 = vperm.xlu0 %336, %v261
        %v338 = vpop.permute.xlu0 %337
        %v340 = vperm.slane %v335, 0
        %v341 = vsub.f32 %v338, %v340
        %v342 = vand.u32 2147483647, %v341
        %v343 = vadd.f32 %v334, %v342
        %v344 = vld [vmem:[%s226 + $0x9] sm:$0x1]
        %345 = vset.pattern.permute.xlu0 9
        %346 = vperm.xlu0 %345, %v261
        %v347 = vpop.permute.xlu0 %346
        %v349 = vperm.slane %v344, 0
        %v350 = vsub.f32 %v347, %v349
        %v351 = vand.u32 2147483647, %v350
        %v352 = vsub.f32 %v343, %v351
        %v353 = vld [vmem:[%s226 + $0xa] sm:$0x1]
        %354 = vset.pattern.permute.xlu0 10
        %355 = vperm.xlu0 %354, %v261
        %v356 = vpop.permute.xlu0 %355
        %v358 = vperm.slane %v353, 0
        %v359 = vsub.f32 %v356, %v358
        %v360 = vand.u32 2147483647, %v359
        %v361 = vsub.f32 %v352, %v360
        %v362 = vld [vmem:[%s226 + $0xb] sm:$0x1]
        %363 = vset.pattern.permute.xlu0 11
        %364 = vperm.xlu0 %363, %v261
        %v365 = vpop.permute.xlu0 %364
        %v367 = vperm.slane %v362, 0
        %v368 = vsub.f32 %v365, %v367
        %v369 = vand.u32 2147483647, %v368
        %v370 = vadd.f32 %v361, %v369
        %v371 = vld [vmem:[%s226 + $0xc] sm:$0x1]
        %372 = vset.pattern.permute.xlu0 12
        %373 = vperm.xlu0 %372, %v261
        %v374 = vpop.permute.xlu0 %373
        %v376 = vperm.slane %v371, 0
        %v377 = vsub.f32 %v374, %v376
        %v378 = vand.u32 2147483647, %v377
        %v379 = vsub.f32 %v370, %v378
        %v380 = vld [vmem:[%s226 + $0xd] sm:$0x1]
        %381 = vset.pattern.permute.xlu0 13
        %382 = vperm.xlu0 %381, %v261
        %v383 = vpop.permute.xlu0 %382
        %v385 = vperm.slane %v380, 0
        %v386 = vsub.f32 %v383, %v385
        %v387 = vand.u32 2147483647, %v386
        %v388 = vsub.f32 %v379, %v387
        %v389 = vld [vmem:[%s226 + $0xe] sm:$0x1]
        %390 = vset.pattern.permute.xlu0 14
        %391 = vperm.xlu0 %390, %v261
        %v392 = vpop.permute.xlu0 %391
        %v394 = vperm.slane %v389, 0
        %v395 = vsub.f32 %v392, %v394
        %v396 = vand.u32 2147483647, %v395
        %v397 = vadd.f32 %v388, %v396
        %v398 = vld [vmem:[%s226 + $0xf] sm:$0x1]
        %399 = vset.pattern.permute.xlu0 15
        %400 = vperm.xlu0 %399, %v261
        %v401 = vpop.permute.xlu0 %400
        %v403 = vperm.slane %v398, 0
        %v404 = vsub.f32 %v401, %v403
        %v405 = vand.u32 2147483647, %v404
        %v406 = vadd.f32 %v397, %v405
        %v407 = vld [vmem:[%s226 + $0x10] sm:$0x1]
        %408 = vset.pattern.permute.xlu0 16
        %409 = vperm.xlu0 %408, %v261
        %v410 = vpop.permute.xlu0 %409
        %v412 = vperm.slane %v407, 0
        %v413 = vsub.f32 %v410, %v412
        %v414 = vand.u32 2147483647, %v413
        %v415 = vsub.f32 %v406, %v414
        %v416 = vld [vmem:[%s226 + $0x11] sm:$0x1]
        %417 = vset.pattern.permute.xlu0 17
        %418 = vperm.xlu0 %417, %v261
        %v419 = vpop.permute.xlu0 %418
        %v421 = vperm.slane %v416, 0
        %v422 = vsub.f32 %v419, %v421
        %v423 = vand.u32 2147483647, %v422
        %v424 = vsub.f32 %v415, %v423
        %v425 = vld [vmem:[%s226 + $0x12] sm:$0x1]
        %426 = vset.pattern.permute.xlu0 18
        %427 = vperm.xlu0 %426, %v261
        %v428 = vpop.permute.xlu0 %427
        %v430 = vperm.slane %v425, 0
        %v431 = vsub.f32 %v428, %v430
        %v432 = vand.u32 2147483647, %v431
        %v433 = vadd.f32 %v424, %v432
        %v434 = vld [vmem:[%s226 + $0x13] sm:$0x1]
        %435 = vset.pattern.permute.xlu0 19
        %436 = vperm.xlu0 %435, %v261
        %v437 = vpop.permute.xlu0 %436
        %v439 = vperm.slane %v434, 0
        %v440 = vsub.f32 %v437, %v439
        %v441 = vand.u32 2147483647, %v440
        %v442 = vadd.f32 %v433, %v441
        %v443 = vld [vmem:[%s226 + $0x14] sm:$0x1]
        %444 = vset.pattern.permute.xlu0 20
        %445 = vperm.xlu0 %444, %v261
        %v446 = vpop.permute.xlu0 %445
        %v448 = vperm.slane %v443, 0
        %v449 = vsub.f32 %v446, %v448
        %v450 = vand.u32 2147483647, %v449
        %v451 = vsub.f32 %v442, %v450
        %v452 = vld [vmem:[%s226 + $0x15] sm:$0x1]
        %453 = vset.pattern.permute.xlu0 21
        %454 = vperm.xlu0 %453, %v261
        %v455 = vpop.permute.xlu0 %454
        %v457 = vperm.slane %v452, 0
        %v458 = vsub.f32 %v455, %v457
        %v459 = vand.u32 2147483647, %v458
        %v460 = vsub.f32 %v451, %v459
        %v461 = vld [vmem:[%s226 + $0x16] sm:$0x1]
        %462 = vset.pattern.permute.xlu0 22
        %463 = vperm.xlu0 %462, %v261
        %v464 = vpop.permute.xlu0 %463
        %v466 = vperm.slane %v461, 0
        %v467 = vsub.f32 %v464, %v466
        %v468 = vand.u32 2147483647, %v467
        %v469 = vsub.f32 %v460, %v468
        %v470 = vld [vmem:[%s226 + $0x17] sm:$0x1]
        %471 = vset.pattern.permute.xlu0 23
        %472 = vperm.xlu0 %471, %v261
        %v473 = vpop.permute.xlu0 %472
        %v475 = vperm.slane %v470, 0
        %v476 = vsub.f32 %v473, %v475
        %v477 = vand.u32 2147483647, %v476
        %v478 = vadd.f32 %v469, %v477
        %v479 = vld [vmem:[%s226 + $0x18] sm:$0x1]
        %480 = vset.pattern.permute.xlu0 24
        %481 = vperm.xlu0 %480, %v261
        %v482 = vpop.permute.xlu0 %481
        %v484 = vperm.slane %v479, 0
        %v485 = vsub.f32 %v482, %v484
        %v486 = vand.u32 2147483647, %v485
        %v487 = vsub.f32 %v478, %v486
        %v488 = vld [vmem:[%s226 + $0x19] sm:$0x1]
        %489 = vset.pattern.permute.xlu0 25
        %490 = vperm.xlu0 %489, %v261
        %v491 = vpop.permute.xlu0 %490
        %v493 = vperm.slane %v488, 0
        %v494 = vsub.f32 %v491, %v493
        %v495 = vand.u32 2147483647, %v494
        %v496 = vadd.f32 %v487, %v495
        %v497 = vld [vmem:[%s226 + $0x1a] sm:$0x1]
        %498 = vset.pattern.permute.xlu0 26
        %499 = vperm.xlu0 %498, %v261
        %v500 = vpop.permute.xlu0 %499
        %v502 = vperm.slane %v497, 0
        %v503 = vsub.f32 %v500, %v502
        %v504 = vand.u32 2147483647, %v503
        %v505 = vsub.f32 %v496, %v504
        %v506 = vld [vmem:[%s226 + $0x1b] sm:$0x1]
        %507 = vset.pattern.permute.xlu0 27
        %508 = vperm.xlu0 %507, %v261
        %v509 = vpop.permute.xlu0 %508
        %v511 = vperm.slane %v506, 0
        %v512 = vsub.f32 %v509, %v511
        %v513 = vand.u32 2147483647, %v512
        %v514 = vadd.f32 %v505, %v513
        %v515 = vld [vmem:[%s226 + $0x1c] sm:$0x1]
        %516 = vset.pattern.permute.xlu0 28
        %517 = vperm.xlu0 %516, %v261
        %v518 = vpop.permute.xlu0 %517
        %v520 = vperm.slane %v515, 0
        %v521 = vsub.f32 %v518, %v520
        %v522 = vand.u32 2147483647, %v521
        %v523 = vadd.f32 %v514, %v522
        %v524 = vld [vmem:[%s226 + $0x1d] sm:$0x1]
        %525 = vset.pattern.permute.xlu0 29
        %526 = vperm.xlu0 %525, %v261
        %v527 = vpop.permute.xlu0 %526
        %v529 = vperm.slane %v524, 0
        %v530 = vsub.f32 %v527, %v529
        %v531 = vand.u32 2147483647, %v530
        %v532 = vsub.f32 %v523, %v531
        %v533 = vld [vmem:[%s226 + $0x1e] sm:$0x1]
        %534 = vset.pattern.permute.xlu0 30
        %535 = vperm.xlu0 %534, %v261
        %v536 = vpop.permute.xlu0 %535
        %v538 = vperm.slane %v533, 0
        %v539 = vsub.f32 %v536, %v538
        %v540 = vand.u32 2147483647, %v539
        %v541 = vsub.f32 %v532, %v540
        %v542 = vld [vmem:[%s226 + $0x1f] sm:$0x1]
        %543 = vset.pattern.permute.xlu0 31
        %544 = vperm.xlu0 %543, %v261
        %v545 = vpop.permute.xlu0 %544
        %v547 = vperm.slane %v542, 0
        %v548 = vsub.f32 %v545, %v547
        %v549 = vand.u32 2147483647, %v548
        %v550 = vsub.f32 %v541, %v549
        %s551 = smul.u32 %s29, 8
        %v552 = vlaneseq
        %v553 = vshrl.u32 %v552, 7
        %v554 = vstv %s551
        %v555 = vadd.s32 %v554, %v553
        %v556 = vlaneseq
        %v557 = vand.u32 %v556, 127
        %vm558 = vcmp.eq.s32.totalorder %v555, %v557
        %v559 = vsel %vm558, -1e+08, %v550
        %vm560 = vcmp.ge.s32.totalorder %v557, 8
        %v561 = vsel %vm560, -inf, %v559
        %562 = vmax.xlane.f32.xlu0 %v561
        %v563 = vpop.xlane.xlu0 %562
        %v564 = vsub.f32 %v561, %v563
        %v565 = vmul.f32 %v564, 1.442695
        %v566 = vpow.pop %v565
        %567 = vadd.xlane.f32.xlu0 %v566
        %v568 = vpop.xlane.xlu0 %567
        %v569 = vrcp.pop %v568
        %v570 = vmul.f32 %v566, %v569
        %571 = vst [vmem:[%s260] sm:$0xff] %v570
        %s572 = sand.u32 %s121, 1
        %s573 = scalar_lea.sflag [#allocation4], %s572
        %s574 = sand.u32 %s121, 1
        %s575 = smul.addr %s574, 8
        %s576 = scalar_lea.vmem [#allocation9], %s575
        // Predicated region
        $region45: #{tpu_custom_call.1} parent=31 // pred_check
          %p577 = pneg %p131
        $region46: #{tpu_custom_call.1} parent=31 // pred_check_branch
          %579 = sbr.rel (%p577) target = $region48
        $region47: #{tpu_custom_call.1} parent=31 // pred_region
          %581 = vsyncadd %s573, 0
          %s582 = sadd.s32 %s29, %s28
          %s583 = smul.addr %s582, 8
          %s584 = scalar_lea.hbm %s3, %s583
          %s586 = sshll.u32 %s576, 4
          %s587 = int_to_ptr.vmem [resolvable:$true] %s586
          %s588 = sshll.u32 %s584, 4
          %s589 = int_to_ptr.hbm [resolvable:$true] %s588
          %591 = dma.vmem_to_hbm [thread:$0]  %s587, 128, %s589, %s573
        $region48: #{tpu_custom_call.1} parent=31 // pred_fallthru
          _
      $region32: #{tpu_custom_call.1} parent=5 // pred_fallthru
        _
      %p592 = scmp.le.s32.totalorder 2, %s19
      // Predicated region
      $region49: #{tpu_custom_call.1} parent=5 // pred_check
        %p593 = pneg %p592
      $region50: #{tpu_custom_call.1} parent=5 // pred_check_branch
        %595 = sbr.rel (%p593) target = $region52
      $region51: #{tpu_custom_call.1} parent=5 // pred_region
        %s596 = ssub.s32 %s19, 2
        // Predicated region
        $region53: #{tpu_custom_call.1} parent=51 // pred_check
          %p597 = pneg %p137
        $region54: #{tpu_custom_call.1} parent=51 // pred_check_branch
          %599 = sbr.rel (%p597) target = $region56
        $region55: #{tpu_custom_call.1} parent=51 // pred_region
          %s600 = sand.u32 %s122, 1
          %s601 = scalar_lea.sflag [#allocation4], %s600
          %s602 = sand.u32 %s122, 1
          %s603 = smul.addr %s602, 8
          %s604 = scalar_lea.vmem [#allocation9], %s603
          %606 = dma.done %s601, 128
        $region56: #{tpu_custom_call.1} parent=51 // pred_fallthru
          _
      $region52: #{tpu_custom_call.1} parent=5 // pred_fallthru
        _
    $region6: #{tpu_custom_call.1} parent=1 // loop_footer
      %s23 = sadd.s32 1, %s19
    $region7: #{tpu_custom_call.1} parent=1 // loop_footer_branch
      %18 = sbr.rel target = $region3
    $region8: #{tpu_custom_call.1} parent=1 // loop_exit
      _
    %607 = vsyncpa [#allocation3], 1
    %s608 = scalar_lea.sflag [#allocation3], 1
    %609 = vsyncpa %s608, 1
    %610 = vsyncpa [#allocation7], 1
    %s611 = scalar_lea.sflag [#allocation7], 1
    %612 = vsyncpa %s611, 1
    %613 = vsyncpa [#allocation4], 1
    %s614 = scalar_lea.sflag [#allocation4], 1
    %615 = vsyncpa %s614, 1
    %616 = vsyncpa [#allocation5], 1
    %s617 = scalar_lea.sflag [#allocation5], 1
    %618 = vsyncpa %s617, 1

</llo_original>
